<compile_context>
chip_gen: v7x
topology: tpu7x:2x2x1
jax: 0.10.0
libtpu: 0.0.40
codegen_flags: <defaults>
</compile_context>

<pallas_src>
import jax
import jax.numpy as jnp
from jax import lax
from jax.experimental import pallas as pl
from jax.experimental.pallas import tpu as pltpu

EPS = 1e-5  # PyTorch BatchNorm2d default


def attn_kernel(x_ref, p_ref, wy_ref, tsum_ref, tm2_ref):
    # x_ref   : (1, CP, HW)   full spatial extent of this batch element; its
    #                         index_map only depends on the batch grid axis, so
    #                         it stays VMEM-resident across the query-tile axis.
    # p_ref   : (8, CP, 1)    [g_w, g_b, th_w, th_b, ph_w, ph_b, W_w, W_b]
    # wy_ref  : (1, CP, TQ)   W-conv(y) for this query tile (pre-BatchNorm)
    # tsum_ref: (1, 1, CP, 1) per-tile per-channel sum of wy
    # tm2_ref : (1, 1, CP, 1) per-tile per-channel centered sum of squares
    TQ = wy_ref.shape[2]
    qi = pl.program_id(1)

    x = x_ref[0]                                   # (CP, HW)

    # Hoist all parameter loads / broadcasts once.
    g_w, g_b = p_ref[0], p_ref[1]                  # (CP, 1) each
    th_w, th_b = p_ref[2], p_ref[3]
    ph_w, ph_b = p_ref[4], p_ref[5]
    w_w, w_b = p_ref[6], p_ref[7]

    # Depthwise 1x1 convs == per-channel affine (broadcast along lanes).
    g_x = x * g_w + g_b                            # (CP, HW)
    phi_x = x * ph_w + ph_b                        # (CP, HW)

    # Query tile of theta: dynamic lane slice of the resident x block.
    q0 = pl.multiple_of(qi * TQ, TQ)
    x_q = x_ref[0, :, pl.ds(q0, TQ)]               # (CP, TQ)
    theta_q = x_q * th_w + th_b                    # (CP, TQ)

    # f[i, j] = sum_c theta_q[c, i] * phi_x[c, j]   -> (TQ, HW)
    f = lax.dot_general(theta_q, phi_x,
                        dimension_numbers=(((0,), (0,)), ((), ())),
                        preferred_element_type=jnp.float32)

    # Row softmax over all keys (HW on the lane axis -> XLU reductions).
    m = jnp.max(f, axis=-1, keepdims=True)
    e = jnp.exp(f - m)
    s = jnp.sum(e, axis=-1, keepdims=True)
    p = e / s                                      # (TQ, HW)

    # y[c, i] = sum_j g_x[c, j] * p[i, j]           -> (CP, TQ)
    y_q = lax.dot_general(g_x, p,
                          dimension_numbers=(((1,), (1,)), ((), ())),
                          preferred_element_type=jnp.float32)

    # W depthwise 1x1 (pre-BatchNorm).
    wy = y_q * w_w + w_b                           # (CP, TQ)
    wy_ref[...] = wy[None]

    # Single-pass BN partials (stable parallel-variance form: tile sum + tile
    # centered sum of squares; combined across tiles in the wrapper).
    t_sum = jnp.sum(wy, axis=1, keepdims=True)     # (CP, 1)
    t_mean = t_sum * (1.0 / TQ)
    t_m2 = jnp.sum((wy - t_mean) ** 2, axis=1, keepdims=True)
    tsum_ref[...] = t_sum[None, None]
    tm2_ref[...] = t_m2[None, None]


def bn_residual_kernel(wy_ref, x_ref, scale_ref, shift_ref, z_ref):
    # z = BatchNorm(W_conv(y)) + x, with BN folded into per-channel scale/shift.
    # wy_ref/x_ref/z_ref: (1, CP, TQ); scale_ref/shift_ref: (CP, 1).
    z_ref[...] = wy_ref[...] * scale_ref[...] + shift_ref[...] + x_ref[...]


def intra_channel_forward(x, params):
    """x: (B, C, H, W) float32.  params: dict of (C,) vectors — depthwise 1x1
    weights/biases for g/theta/phi/W plus BatchNorm gamma (bn_w) / beta (bn_b).
    BatchNorm runs in training mode (biased batch statistics over N,H,W)."""
    B, C, H, W = x.shape
    HW = H * W
    CP = ((C + 7) // 8) * 8                  # pad channels to full sublanes
    TQ = 128 if HW % 128 == 0 else HW        # lane-dense query tile
    n_q = HW // TQ

    xf = x.reshape(B, C, HW).astype(jnp.float32)
    if CP != C:
        xf = jnp.pad(xf, ((0, 0), (0, CP - C), (0, 0)))

    def cpad(v):
        v = v.astype(jnp.float32)
        return jnp.pad(v, (0, CP - C)) if CP != C else v

    p_pack = jnp.stack(
        [cpad(params[k]) for k in
         ("g_w", "g_b", "th_w", "th_b", "ph_w", "ph_b", "W_w", "W_b")],
        axis=0).reshape(8, CP, 1)

    vmem_limit = 32 * 1024 * 1024  # explicit budget; safe on v5e/v6e/v7x

    wy, t_sum, t_m2 = pl.pallas_call(
        attn_kernel,
        out_shape=(
            jax.ShapeDtypeStruct((B, CP, HW), jnp.float32),
            jax.ShapeDtypeStruct((B, n_q, CP, 1), jnp.float32),
            jax.ShapeDtypeStruct((B, n_q, CP, 1), jnp.float32),
        ),
        grid=(B, n_q),
        in_specs=[
            pl.BlockSpec((1, CP, HW), lambda b, q: (b, 0, 0)),
            pl.BlockSpec((8, CP, 1), lambda b, q: (0, 0, 0)),
        ],
        out_specs=(
            pl.BlockSpec((1, CP, TQ), lambda b, q: (b, 0, q)),
            pl.BlockSpec((1, 1, CP, 1), lambda b, q: (b, q, 0, 0)),
            pl.BlockSpec((1, 1, CP, 1), lambda b, q: (b, q, 0, 0)),
        ),
        compiler_params=pltpu.CompilerParams(
            dimension_semantics=("parallel", "parallel"),
            vmem_limit_bytes=vmem_limit),
    )(xf, p_pack)

    # Combine per-tile partials -> batch statistics (PyTorch training-mode BN,
    # biased variance over N*H*W).  O(B * n_q * C) work only.
    n_total = float(B * HW)
    mean = jnp.sum(t_sum, axis=(0, 1)) / n_total                     # (CP, 1)
    t_mean = t_sum / float(TQ)
    m2 = (jnp.sum(t_m2, axis=(0, 1))
          + float(TQ) * jnp.sum((t_mean - mean) ** 2, axis=(0, 1)))
    var = m2 / n_total
    inv = lax.rsqrt(var + EPS)
    scale = cpad(params["bn_w"]).reshape(CP, 1) * inv                # (CP, 1)
    shift = cpad(params["bn_b"]).reshape(CP, 1) - mean * scale

    z = pl.pallas_call(
        bn_residual_kernel,
        out_shape=jax.ShapeDtypeStruct((B, CP, HW), jnp.float32),
        grid=(B, n_q),
        in_specs=[
            pl.BlockSpec((1, CP, TQ), lambda b, q: (b, 0, q)),
            pl.BlockSpec((1, CP, TQ), lambda b, q: (b, 0, q)),
            pl.BlockSpec((CP, 1), lambda b, q: (0, 0)),
            pl.BlockSpec((CP, 1), lambda b, q: (0, 0)),
        ],
        out_specs=pl.BlockSpec((1, CP, TQ), lambda b, q: (b, 0, q)),
        compiler_params=pltpu.CompilerParams(
            dimension_semantics=("parallel", "parallel"),
            vmem_limit_bytes=vmem_limit),
    )(wy, xf, scale, shift)

    return z[:, :C, :].reshape(B, C, H, W)


def reference(x, params):
    """Pure-JAX mirror of Intra_channel.forward (training-mode BatchNorm)."""
    B, C, H, W = x.shape
    HW = H * W

    def dw1x1(t, w, b):  # depthwise 1x1 conv, groups=C  ==  per-channel affine
        return t * w.reshape(1, C, 1, 1) + b.reshape(1, C, 1, 1)

    g_x = dw1x1(x, params["g_w"], params["g_b"]).reshape(B, C, HW).transpose(0, 2, 1)
    th_x = dw1x1(x, params["th_w"], params["th_b"]).reshape(B, C, HW).transpose(0, 2, 1)
    ph_x = dw1x1(x, params["ph_w"], params["ph_b"]).reshape(B, C, HW)
    f = jnp.einsum("bic,bcj->bij", th_x, ph_x, precision=lax.Precision.HIGHEST)
    p = jax.nn.softmax(f, axis=-1)
    y = jnp.einsum("bij,bjc->bic", p, g_x, precision=lax.Precision.HIGHEST)
    y = y.transpose(0, 2, 1).reshape(B, C, H, W)
    wy = dw1x1(y, params["W_w"], params["W_b"])
    mean = wy.mean(axis=(0, 2, 3), keepdims=True)
    var = ((wy - mean) ** 2).mean(axis=(0, 2, 3), keepdims=True)
    wyn = (wy - mean) * lax.rsqrt(var + EPS)
    wyn = wyn * params["bn_w"].reshape(1, C, 1, 1) + params["bn_b"].reshape(1, C, 1, 1)
    return wyn + x


if __name__ == "__main__":
    B, C, H, W = 2, 4, 16, 16
    key = jax.random.PRNGKey(0)
    keys = jax.random.split(key, 12)

    x = jax.random.normal(keys[0], (B, C, H, W), dtype=jnp.float32)

    params = {
        "g_w": jax.random.normal(keys[1], (C,), jnp.float32),
        "g_b": 0.1 * jax.random.normal(keys[2], (C,), jnp.float32),
        "th_w": jax.random.normal(keys[3], (C,), jnp.float32),
        "th_b": 0.1 * jax.random.normal(keys[4], (C,), jnp.float32),
        "ph_w": jax.random.normal(keys[5], (C,), jnp.float32),
        "ph_b": 0.1 * jax.random.normal(keys[6], (C,), jnp.float32),
        "W_w": jax.random.normal(keys[7], (C,), jnp.float32),
        "W_b": 0.1 * jax.random.normal(keys[8], (C,), jnp.float32),
        # Non-trivial BN affine to exercise the full normalize path.  (The
        # module's default init sets these to zero -> checked separately below.)
        "bn_w": jax.random.normal(keys[9], (C,), jnp.float32),
        "bn_b": 0.1 * jax.random.normal(keys[10], (C,), jnp.float32),
    }

    out = jax.block_until_ready(intra_channel_forward(x, params))
    ref = reference(x, params)
    assert out.shape == (B, C, H, W)
    assert bool(jnp.allclose(out, ref, atol=1e-3, rtol=1e-3)), "mismatch vs reference"

    # Module-default init (BN gamma=0, beta=0)  =>  z == x.
    params0 = dict(params,
                   bn_w=jnp.zeros((C,), jnp.float32),
                   bn_b=jnp.zeros((C,), jnp.float32))
    out0 = jax.block_until_ready(intra_channel_forward(x, params0))
    assert bool(jnp.allclose(out0, x, atol=1e-5, rtol=1e-5)), "default-init mismatch"

    print("KERNEL_OK")
</pallas_src>

<mosaic_0001>
module attributes {stable_mosaic.version = 11 : i64} {
  func.func @attn_kernel(%arg0: i32, %arg1: i32, %arg2: memref<1x8x256xf32, #tpu.memory_space<vmem>>, %arg3: memref<8x8x1xf32, #tpu.memory_space<vmem>>, %arg4: memref<1x8x128xf32, #tpu.memory_space<vmem>>, %arg5: memref<1x1x8x1xf32, #tpu.memory_space<vmem>>, %arg6: memref<1x1x8x1xf32, #tpu.memory_space<vmem>>) attributes {dimension_semantics = [#tpu.dimension_semantics<parallel>, #tpu.dimension_semantics<parallel>], iteration_bounds = array<i64: 2, 2>, scalar_prefetch = 0 : i64, scratch_operands = 0 : i64, tpu.core_type = #tpu.core_type<tc>, window_params = [{transform_indices = @transform_0, window_bounds = array<i64: 1, 8, 256>}, {pipeline_mode = #tpu.pipeline_mode<synchronous>, transform_indices = @transform_1, window_bounds = array<i64: 8, 8, 1>}, {transform_indices = @transform_2, window_bounds = array<i64: 1, 8, 128>}, {transform_indices = @transform_3, window_bounds = array<i64: 1, 1, 8, 1>}, {transform_indices = @transform_4, window_bounds = array<i64: 1, 1, 8, 1>}]} {
    %c0 = arith.constant 0 : index
    %c0_0 = arith.constant 0 : index
    %c0_1 = arith.constant 0 : index
    %0 = vector.load %arg2[%c0, %c0_0, %c0_1] : memref<1x8x256xf32, #tpu.memory_space<vmem>>, vector<1x8x256xf32>
    %1 = vector.shape_cast %0 : vector<1x8x256xf32> to vector<8x256xf32>
    %c0_2 = arith.constant 0 : index
    %c0_3 = arith.constant 0 : index
    %c0_4 = arith.constant 0 : index
    %2 = vector.load %arg3[%c0_2, %c0_3, %c0_4] : memref<8x8x1xf32, #tpu.memory_space<vmem>>, vector<1x8x1xf32>
    %3 = vector.shape_cast %2 : vector<1x8x1xf32> to vector<8x1xf32>
    %c1 = arith.constant 1 : index
    %c0_5 = arith.constant 0 : index
    %c0_6 = arith.constant 0 : index
    %4 = vector.load %arg3[%c1, %c0_5, %c0_6] : memref<8x8x1xf32, #tpu.memory_space<vmem>>, vector<1x8x1xf32>
    %5 = vector.shape_cast %4 : vector<1x8x1xf32> to vector<8x1xf32>
    %c2 = arith.constant 2 : index
    %c0_7 = arith.constant 0 : index
    %c0_8 = arith.constant 0 : index
    %6 = vector.load %arg3[%c2, %c0_7, %c0_8] : memref<8x8x1xf32, #tpu.memory_space<vmem>>, vector<1x8x1xf32>
    %7 = vector.shape_cast %6 : vector<1x8x1xf32> to vector<8x1xf32>
    %c3 = arith.constant 3 : index
    %c0_9 = arith.constant 0 : index
    %c0_10 = arith.constant 0 : index
    %8 = vector.load %arg3[%c3, %c0_9, %c0_10] : memref<8x8x1xf32, #tpu.memory_space<vmem>>, vector<1x8x1xf32>
    %9 = vector.shape_cast %8 : vector<1x8x1xf32> to vector<8x1xf32>
    %c4 = arith.constant 4 : index
    %c0_11 = arith.constant 0 : index
    %c0_12 = arith.constant 0 : index
    %10 = vector.load %arg3[%c4, %c0_11, %c0_12] : memref<8x8x1xf32, #tpu.memory_space<vmem>>, vector<1x8x1xf32>
    %11 = vector.shape_cast %10 : vector<1x8x1xf32> to vector<8x1xf32>
    %c5 = arith.constant 5 : index
    %c0_13 = arith.constant 0 : index
    %c0_14 = arith.constant 0 : index
    %12 = vector.load %arg3[%c5, %c0_13, %c0_14] : memref<8x8x1xf32, #tpu.memory_space<vmem>>, vector<1x8x1xf32>
    %13 = vector.shape_cast %12 : vector<1x8x1xf32> to vector<8x1xf32>
    %c6 = arith.constant 6 : index
    %c0_15 = arith.constant 0 : index
    %c0_16 = arith.constant 0 : index
    %14 = vector.load %arg3[%c6, %c0_15, %c0_16] : memref<8x8x1xf32, #tpu.memory_space<vmem>>, vector<1x8x1xf32>
    %15 = vector.shape_cast %14 : vector<1x8x1xf32> to vector<8x1xf32>
    %c7 = arith.constant 7 : index
    %c0_17 = arith.constant 0 : index
    %c0_18 = arith.constant 0 : index
    %16 = vector.load %arg3[%c7, %c0_17, %c0_18] : memref<8x8x1xf32, #tpu.memory_space<vmem>>, vector<1x8x1xf32>
    %17 = vector.shape_cast %16 : vector<1x8x1xf32> to vector<8x1xf32>
    %18 = vector.broadcast %3 : vector<8x1xf32> to vector<8x256xf32>
    %19 = arith.mulf %1, %18 : vector<8x256xf32>
    %20 = vector.broadcast %5 : vector<8x1xf32> to vector<8x256xf32>
    %21 = arith.addf %19, %20 : vector<8x256xf32>
    %22 = vector.broadcast %11 : vector<8x1xf32> to vector<8x256xf32>
    %23 = arith.mulf %1, %22 : vector<8x256xf32>
    %24 = vector.broadcast %13 : vector<8x1xf32> to vector<8x256xf32>
    %25 = arith.addf %23, %24 : vector<8x256xf32>
    %c128_i32 = arith.constant 128 : i32
    %26 = arith.muli %arg1, %c128_i32 : i32
    %27 = tpu.assume_multiple %26, 128 : i32
    %c0_19 = arith.constant 0 : index
    %c0_20 = arith.constant 0 : index
    %28 = arith.index_cast %27 : i32 to index
    %29 = vector.load %arg2[%c0_19, %c0_20, %28] : memref<1x8x256xf32, #tpu.memory_space<vmem>>, vector<1x8x128xf32>
    %30 = vector.shape_cast %29 : vector<1x8x128xf32> to vector<8x128xf32>
    %31 = vector.broadcast %7 : vector<8x1xf32> to vector<8x128xf32>
    %32 = arith.mulf %30, %31 : vector<8x128xf32>
    %33 = vector.broadcast %9 : vector<8x1xf32> to vector<8x128xf32>
    %34 = arith.addf %32, %33 : vector<8x128xf32>
    %cst = arith.constant dense<0.000000e+00> : vector<128x256xf32>
    %35 = tpu.matmul %34, %25, %cst {dimension_numbers = #tpu.dot_dimension_numbers<[0], [0], [1], [1], [0, 1, 1, 1], [], []>} : vector<8x128xf32>, vector<8x256xf32>, vector<128x256xf32> -> vector<128x256xf32>
    %cst_21 = arith.constant dense<0xFF800000> : vector<128xf32>
    %36 = vector.multi_reduction <maximumf>, %35, %cst_21 [1] : vector<128x256xf32> to vector<128xf32>
    %37 = vector.shape_cast %36 : vector<128xf32> to vector<128x1xf32>
    %38 = vector.broadcast %37 : vector<128x1xf32> to vector<128x256xf32>
    %39 = arith.subf %35, %38 : vector<128x256xf32>
    %40 = math.exp %39 : vector<128x256xf32>
    %cst_22 = arith.constant dense<0.000000e+00> : vector<128xf32>
    %41 = vector.multi_reduction <add>, %40, %cst_22 [1] : vector<128x256xf32> to vector<128xf32>
    %42 = vector.shape_cast %41 : vector<128xf32> to vector<128x1xf32>
    %43 = vector.broadcast %42 : vector<128x1xf32> to vector<128x256xf32>
    %44 = arith.divf %40, %43 : vector<128x256xf32>
    %cst_23 = arith.constant dense<0.000000e+00> : vector<8x128xf32>
    %45 = tpu.matmul %21, %44, %cst_23 {dimension_numbers = #tpu.dot_dimension_numbers<[1], [1], [0], [0], [0, 0, 1, 0], [], []>} : vector<8x256xf32>, vector<128x256xf32>, vector<8x128xf32> -> vector<8x128xf32>
    %46 = vector.broadcast %15 : vector<8x1xf32> to vector<8x128xf32>
    %47 = arith.mulf %45, %46 : vector<8x128xf32>
    %48 = vector.broadcast %17 : vector<8x1xf32> to vector<8x128xf32>
    %49 = arith.addf %47, %48 : vector<8x128xf32>
    %50 = vector.shape_cast %49 : vector<8x128xf32> to vector<1x8x128xf32>
    %c0_24 = arith.constant 0 : index
    %c0_25 = arith.constant 0 : index
    %c0_26 = arith.constant 0 : index
    %51 = vector.load %arg4[%c0_24, %c0_25, %c0_26] : memref<1x8x128xf32, #tpu.memory_space<vmem>>, vector<1x8x128xf32>
    tpu.vector_store %arg4[%c0_24, %c0_25, %c0_26], %50 {strides = array<i32>} : memref<1x8x128xf32, #tpu.memory_space<vmem>>, vector<1x8x128xf32>,
    %cst_27 = arith.constant dense<0.000000e+00> : vector<8xf32>
    %52 = vector.multi_reduction <add>, %49, %cst_27 [1] : vector<8x128xf32> to vector<8xf32>
    %53 = vector.shape_cast %52 : vector<8xf32> to vector<8x1xf32>
    %cst_28 = arith.constant 7.812500e-03 : f32
    %54 = vector.broadcast %cst_28 : f32 to vector<8x1xf32>
    %55 = arith.mulf %53, %54 : vector<8x1xf32>
    %56 = vector.broadcast %55 : vector<8x1xf32> to vector<8x128xf32>
    %57 = arith.subf %49, %56 : vector<8x128xf32>
    %58 = arith.mulf %57, %57 : vector<8x128xf32>
    %cst_29 = arith.constant dense<0.000000e+00> : vector<8xf32>
    %59 = vector.multi_reduction <add>, %58, %cst_29 [1] : vector<8x128xf32> to vector<8xf32>
    %60 = vector.shape_cast %59 : vector<8xf32> to vector<8x1xf32>
    %61 = vector.shape_cast %53 : vector<8x1xf32> to vector<1x1x8x1xf32>
    %c0_30 = arith.constant 0 : index
    %c0_31 = arith.constant 0 : index
    %c0_32 = arith.constant 0 : index
    %c0_33 = arith.constant 0 : index
    %62 = vector.load %arg5[%c0_30, %c0_31, %c0_32, %c0_33] : memref<1x1x8x1xf32, #tpu.memory_space<vmem>>, vector<1x1x8x1xf32>
    tpu.vector_store %arg5[%c0_30, %c0_31, %c0_32, %c0_33], %61 {strides = array<i32>} : memref<1x1x8x1xf32, #tpu.memory_space<vmem>>, vector<1x1x8x1xf32>,
    %63 = vector.shape_cast %60 : vector<8x1xf32> to vector<1x1x8x1xf32>
    %c0_34 = arith.constant 0 : index
    %c0_35 = arith.constant 0 : index
    %c0_36 = arith.constant 0 : index
    %c0_37 = arith.constant 0 : index
    %64 = vector.load %arg6[%c0_34, %c0_35, %c0_36, %c0_37] : memref<1x1x8x1xf32, #tpu.memory_space<vmem>>, vector<1x1x8x1xf32>
    tpu.vector_store %arg6[%c0_34, %c0_35, %c0_36, %c0_37], %63 {strides = array<i32>} : memref<1x1x8x1xf32, #tpu.memory_space<vmem>>, vector<1x1x8x1xf32>,
    return
  }
  func.func @transform_0(%arg0: i32, %arg1: i32) -> (i32, i32, i32) {
    %c0_i32 = arith.constant 0 : i32
    %c0_i32_0 = arith.constant 0 : i32
    %c0_i32_1 = arith.constant 0 : i32
    return %arg0, %c0_i32, %c0_i32_0 : i32, i32, i32
  }
  func.func @transform_1(%arg0: i32, %arg1: i32) -> (i32, i32, i32) {
    %c0_i32 = arith.constant 0 : i32
    %c0_i32_0 = arith.constant 0 : i32
    %c0_i32_1 = arith.constant 0 : i32
    %c0_i32_2 = arith.constant 0 : i32
    return %c0_i32, %c0_i32_0, %c0_i32_1 : i32, i32, i32
  }
  func.func @transform_2(%arg0: i32, %arg1: i32) -> (i32, i32, i32) {
    %c0_i32 = arith.constant 0 : i32
    %c0_i32_0 = arith.constant 0 : i32
    return %arg0, %c0_i32, %arg1 : i32, i32, i32
  }
  func.func @transform_3(%arg0: i32, %arg1: i32) -> (i32, i32, i32, i32) {
    %c0_i32 = arith.constant 0 : i32
    %c0_i32_0 = arith.constant 0 : i32
    %c0_i32_1 = arith.constant 0 : i32
    return %arg0, %arg1, %c0_i32, %c0_i32_0 : i32, i32, i32, i32
  }
  func.func @transform_4(%arg0: i32, %arg1: i32) -> (i32, i32, i32, i32) {
    %c0_i32 = arith.constant 0 : i32
    %c0_i32_0 = arith.constant 0 : i32
    %c0_i32_1 = arith.constant 0 : i32
    return %arg0, %arg1, %c0_i32, %c0_i32_0 : i32, i32, i32, i32
  }
}

</mosaic_0001>

<llo_original>
// kernel: tpu_custom_call.1
$region0: #{tpu_custom_call.1}
  #allocation0 [shape = 'u32[]', space=smem, size = 0x4, offset = 0x4, fixed_abs, tag = 'smem constant byte address 0x4 - core index']
  #allocation1 [shape = 'u32[144,128]{1,0:T(1,128)}', space=vmem, size = 0x12000, scoped, tag = 'internal scratch']
  %s0 = inlined_call_operand.vmem [shape: f32[2,8,256], index: 0, kind: input, shape index: {}]
  %s1 = inlined_call_operand.vmem [shape: f32[8,8,1], index: 1, kind: input, shape index: {}]
  %s2 = inlined_call_operand.hbm [shape: f32[2,8,256], index: 2, kind: output, shape index: {0}]
  %s3 = inlined_call_operand.vmem [shape: f32[2,2,8,1], index: 3, kind: output, shape index: {1}]
  %s4 = inlined_call_operand.vmem [shape: f32[2,2,8,1], index: 4, kind: output, shape index: {2}]
  %5 = xla_tuple %s2, %s3, %s4
  %s6 = sld [smem:[#allocation0]]
  $region57: #{tpu_custom_call.1} parent=0
    _
  %s8 = ssub.s32 1, %s6
  %s9 = scalar_select 0, %s8, %s6
  $region1: #{tpu_custom_call.1} parent=0
    #allocation2 [shape = 'u8[8192]{0}', space=vmem, size = 0x2000, scoped, tag = 'output window, operand 0']
    #allocation3 [shape = 's32[2]{0}', space=sflag, size = 0x8, scoped, tag = 'scoped memory for tpu_custom_call.1']
    %10 = vsyncpa [#allocation3], 0
    %s11 = scalar_lea.sflag [#allocation3], 1
    %12 = vsyncpa %s11, 0
    loop: start=0, step=1, limit=6
    $region2: #{tpu_custom_call.1} parent=1 // loop_pre_header
      _
    $region3: #{tpu_custom_call.1} parent=1 // loop_header
      %s14 = sphi 0, %s18
      %p15 = scmp.ge.s32.totalorder %s14, 6
      %s21 = sphi 0, %s33
      %s22 = sphi 0, %s29
      %s23 = sphi 0, %s21
      %s24 = sphi 0, %s22
      %s25 = sphi 0, %s23
      %s26 = sphi 0, %s24
      %s36 = sphi 0, %s38
      %s39 = sphi 0, %s36
      %s40 = sphi 0, %s39
      %s56 = sphi 0, %s40
      %s60 = sphi 0, %s60
      %s62 = sphi 0, %s60
      %s63 = sphi 0, %s62
      %s77 = sphi 0, %s63
      %s85 = sphi 0, %s87
      %s88 = sphi 0, %s85
      %s89 = sphi 0, %s88
      %s105 = sphi 0, %s89
      %s113 = sphi 0, %s115
      %s116 = sphi 0, %s113
      %s117 = sphi 0, %s116
      %s133 = sphi 0, %s117
      %s141 = sphi 0, %s143
      %s144 = sphi 0, %s141
      %s145 = sphi 0, %s144
      %s161 = sphi 0, %s145
    $region4: #{tpu_custom_call.1} parent=1 // loop_header_branch
      %17 = sbr.rel (%p15) target = $region8
    $region5: #{tpu_custom_call.1} parent=1 // loop_body
      %s19 = ssub.s32 %s14, 1
      %s20 = ssub.s32 %s14, 2
      %s27 = sadd.s32 1, %s22
      %p28 = scmp.ge.s32.totalorder %s27, 2
      %s29 = scalar_select %p28, 0, %s27
      %s30 = sadd.s32 1, %s21
      %s31 = scalar_select %p28, %s30, %s21
      %p32 = scmp.ge.s32.totalorder %s31, 2
      %s33 = scalar_select %p32, 0, %s31
      %s34 = ssub.s32 %s21, %s33
      %p35 = scmp.eq.s32.totalorder %s34, 0
      %s37 = sadd.s32 %s36, 1
      %s38 = scalar_select %p35, %s36, %s37
      %p41 = pneg %p35
      %p42 = scmp.eq.s32.totalorder %s14, 3
      %p43 = por %p41, %p42
      %p44 = scmp.ne.s32.totalorder %s36, %s39
      %p45 = scmp.eq.s32.totalorder %s14, 0
      %p46 = por %p44, %p45
      %p47 = scmp.ne.s32.totalorder %s36, %s39
      %p48 = scmp.eq.s32.totalorder %s19, 3
      %p49 = por %p47, %p48
      %p50 = scmp.ne.s32.totalorder %s39, %s40
      %p51 = scmp.eq.s32.totalorder %s19, 0
      %p52 = por %p50, %p51
      %p53 = scmp.ne.s32.totalorder %s39, %s40
      %p54 = scmp.eq.s32.totalorder %s20, 3
      %p55 = por %p53, %p54
      %p57 = scmp.ne.s32.totalorder %s40, %s56
      %p58 = scmp.eq.s32.totalorder %s20, 0
      %p59 = por %p57, %p58
      %s61 = sadd.s32 %s60, 1
      %p64 = scmp.eq.s32.totalorder %s14, 3
      %p65 = scmp.ne.s32.totalorder %s60, %s62
      %p66 = scmp.eq.s32.totalorder %s14, 0
      %p67 = por %p65, %p66
      %p68 = scmp.ne.s32.totalorder %s60, %s62
      %p69 = scmp.eq.s32.totalorder %s19, 3
      %p70 = por %p68, %p69
      %p71 = scmp.ne.s32.totalorder %s62, %s63
      %p72 = scmp.eq.s32.totalorder %s19, 0
      %p73 = por %p71, %p72
      %p74 = scmp.ne.s32.totalorder %s62, %s63
      %p75 = scmp.eq.s32.totalorder %s20, 3
      %p76 = por %p74, %p75
      %p78 = scmp.ne.s32.totalorder %s63, %s77
      %p79 = scmp.eq.s32.totalorder %s20, 0
      %p80 = por %p78, %p79
      %s81 = ssub.s32 %s21, %s33
      %s82 = ssub.s32 %s22, %s29
      %s83 = sor.u32 %s81, %s82
      %p84 = scmp.eq.s32.totalorder %s83, 0
      %s86 = sadd.s32 %s85, 1
      %s87 = scalar_select %p84, %s85, %s86
      %p90 = pneg %p84
      %p91 = scmp.eq.s32.totalorder %s14, 3
      %p92 = por %p90, %p91
      %p93 = scmp.ne.s32.totalorder %s85, %s88
      %p94 = scmp.eq.s32.totalorder %s14, 0
      %p95 = por %p93, %p94
      %p96 = scmp.ne.s32.totalorder %s85, %s88
      %p97 = scmp.eq.s32.totalorder %s19, 3
      %p98 = por %p96, %p97
      %p99 = scmp.ne.s32.totalorder %s88, %s89
      %p100 = scmp.eq.s32.totalorder %s19, 0
      %p101 = por %p99, %p100
      %p102 = scmp.ne.s32.totalorder %s88, %s89
      %p103 = scmp.eq.s32.totalorder %s20, 3
      %p104 = por %p102, %p103
      %p106 = scmp.ne.s32.totalorder %s89, %s105
      %p107 = scmp.eq.s32.totalorder %s20, 0
      %p108 = por %p106, %p107
      %s109 = ssub.s32 %s21, %s33
      %s110 = ssub.s32 %s22, %s29
      %s111 = sor.u32 %s109, %s110
      %p112 = scmp.eq.s32.totalorder %s111, 0
      %s114 = sadd.s32 %s113, 1
      %s115 = scalar_select %p112, %s113, %s114
      %p118 = pneg %p112
      %p119 = scmp.eq.s32.totalorder %s14, 3
      %p120 = por %p118, %p119
      %p121 = scmp.ne.s32.totalorder %s113, %s116
      %p122 = scmp.eq.s32.totalorder %s14, 0
      %p123 = por %p121, %p122
      %p124 = scmp.ne.s32.totalorder %s113, %s116
      %p125 = scmp.eq.s32.totalorder %s19, 3
      %p126 = por %p124, %p125
      %p127 = scmp.ne.s32.totalorder %s116, %s117
      %p128 = scmp.eq.s32.totalorder %s19, 0
      %p129 = por %p127, %p128
      %p130 = scmp.ne.s32.totalorder %s116, %s117
      %p131 = scmp.eq.s32.totalorder %s20, 3
      %p132 = por %p130, %p131
      %p134 = scmp.ne.s32.totalorder %s117, %s133
      %p135 = scmp.eq.s32.totalorder %s20, 0
      %p136 = por %p134, %p135
      %s137 = ssub.s32 %s21, %s33
      %s138 = ssub.s32 %s22, %s29
      %s139 = sor.u32 %s137, %s138
      %p140 = scmp.eq.s32.totalorder %s139, 0
      %s142 = sadd.s32 %s141, 1
      %s143 = scalar_select %p140, %s141, %s142
      %p146 = pneg %p140
      %p147 = scmp.eq.s32.totalorder %s14, 3
      %p148 = por %p146, %p147
      %p149 = scmp.ne.s32.totalorder %s141, %s144
      %p150 = scmp.eq.s32.totalorder %s14, 0
      %p151 = por %p149, %p150
      %p152 = scmp.ne.s32.totalorder %s141, %s144
      %p153 = scmp.eq.s32.totalorder %s19, 3
      %p154 = por %p152, %p153
      %p155 = scmp.ne.s32.totalorder %s144, %s145
      %p156 = scmp.eq.s32.totalorder %s19, 0
      %p157 = por %p155, %p156
      %p158 = scmp.ne.s32.totalorder %s144, %s145
      %p159 = scmp.eq.s32.totalorder %s20, 3
      %p160 = por %p158, %p159
      %p162 = scmp.ne.s32.totalorder %s145, %s161
      %p163 = scmp.eq.s32.totalorder %s20, 0
      %p164 = por %p162, %p163
      %p165 = scmp.le.s32.totalorder 1, %s14
      %p166 = scmp.lt.s32.totalorder %s14, 5
      %p167 = pnand %p165, %p166
      %p168 = pneg %p167
      // Predicated region
      $region9: #{tpu_custom_call.1} parent=5 // pred_check
        _
      $region10: #{tpu_custom_call.1} parent=5 // pred_check_branch
        %170 = sbr.rel (%p167) target = $region12
      $region11: #{tpu_custom_call.1} parent=5 // pred_region
        %s171 = ssub.s32 %s14, 1
        // Predicated region
        $region13: #{tpu_custom_call.1} parent=11 // pred_check
          %p172 = pneg %p73
        $region14: #{tpu_custom_call.1} parent=11 // pred_check_branch
          %174 = sbr.rel (%p172) target = $region16
        $region15: #{tpu_custom_call.1} parent=11 // pred_region
          _
        $region16: #{tpu_custom_call.1} parent=11 // pred_fallthru
          _
      $region12: #{tpu_custom_call.1} parent=5 // pred_fallthru
        _
      %p175 = scmp.lt.s32.totalorder %s14, 4
      // Predicated region
      $region17: #{tpu_custom_call.1} parent=5 // pred_check
        %p176 = pneg %p175
      $region18: #{tpu_custom_call.1} parent=5 // pred_check_branch
        %178 = sbr.rel (%p176) target = $region20
      $region19: #{tpu_custom_call.1} parent=5 // pred_region
        // Predicated region
        $region21: #{tpu_custom_call.1} parent=19 // pred_check
          %p179 = pneg %p46
        $region22: #{tpu_custom_call.1} parent=19 // pred_check_branch
          %181 = sbr.rel (%p179) target = $region24
        $region23: #{tpu_custom_call.1} parent=19 // pred_region
          %p182 = scmp.lt.s32.totalorder %s21, 1
          %s183 = scalar_select %p182, %s21, 1
          %s184 = smul.addr %s183, 2
          %s185 = smul.addr %s184, 8
          %s186 = scalar_lea.vmem %s0, %s185
        $region24: #{tpu_custom_call.1} parent=19 // pred_fallthru
          _
      $region20: #{tpu_custom_call.1} parent=5 // pred_fallthru
        _
      %p187 = scmp.le.s32.totalorder 1, %s14
      %p188 = scmp.lt.s32.totalorder %s14, 5
      %p189 = pnand %p187, %p188
      %p190 = pneg %p189
      // Predicated region
      $region25: #{tpu_custom_call.1} parent=5 // pred_check
        _
      $region26: #{tpu_custom_call.1} parent=5 // pred_check_branch
        %192 = sbr.rel (%p189) target = $region28
      $region27: #{tpu_custom_call.1} parent=5 // pred_region
        %s193 = ssub.s32 %s14, 1
        %p194 = scmp.lt.s32.totalorder %s23, 1
        %s195 = scalar_select %p194, %s23, 1
        %s196 = smul.addr %s195, 2
        %s197 = smul.addr %s196, 8
        %s198 = scalar_lea.vmem %s0, %s197
        %p199 = pneg %p52
        %p200 = pneg %p49
        %p201 = pneg %p73
        %p202 = pneg %p70
        %p203 = pneg %p101
        %p204 = pneg %p98
        %s205 = sand.u32 %s88, 1
        %s206 = scalar_lea.sflag [#allocation3], %s205
        %s207 = sand.u32 %s88, 1
        %s208 = smul.addr %s207, 8
        %s209 = scalar_lea.vmem [#allocation2], %s208
        %p210 = pneg %p129
        %p211 = pneg %p126
        %p212 = scmp.lt.s32.totalorder %s23, 1
        %s213 = scalar_select %p212, %s23, 1
        %p214 = scmp.lt.s32.totalorder %s24, 1
        %s215 = scalar_select %p214, %s24, 1
        %s216 = smul.addr %s213, 2
        %s217 = sadd.s32 %s215, %s216
        %s218 = smul.addr %s217, 8
        %s219 = scalar_lea.vmem %s3, %s218
        %p220 = pneg %p157
        %p221 = pneg %p154
        %p222 = scmp.lt.s32.totalorder %s23, 1
        %s223 = scalar_select %p222, %s23, 1
        %p224 = scmp.lt.s32.totalorder %s24, 1
        %s225 = scalar_select %p224, %s24, 1
        %s226 = smul.addr %s223, 2
        %s227 = sadd.s32 %s225, %s226
        %s228 = smul.addr %s227, 8
        %s229 = scalar_lea.vmem %s4, %s228
        %p230 = scmp.lt.s32.totalorder %s23, 1
        %s231 = scalar_select %p230, %s23, 1
        %s232 = smul.addr %s231, 2
        %s233 = smul.addr %s232, 8
        %s234 = scalar_lea.vmem %s0, %s233
        %p235 = scmp.lt.s32.totalorder %s23, 1
        %s236 = scalar_select %p235, %s23, 1
        %p237 = scmp.lt.s32.totalorder %s24, 1
        %s238 = scalar_select %p237, %s24, 1
        %s239 = smul.addr %s236, 2
        %s240 = sadd.s32 %s238, %s239
        %s241 = smul.addr %s240, 8
        %s242 = scalar_lea.vmem %s3, %s241
        %p243 = scmp.lt.s32.totalorder %s23, 1
        %s244 = scalar_select %p243, %s23, 1
        %p245 = scmp.lt.s32.totalorder %s24, 1
        %s246 = scalar_select %p245, %s24, 1
        %s247 = smul.addr %s244, 2
        %s248 = sadd.s32 %s246, %s247
        %s249 = smul.addr %s248, 8
        %s250 = scalar_lea.vmem %s4, %s249
        %v251 = vld [vmem:[%s234] sm:$0xff]
        %v252 = vld [vmem:[%s234 + $0x8] sm:$0xff]
        %v253 = vld [vmem:[%s1] sm:$0xff]
        %s254 = scalar_lea.vmem %s1, 8
        %v255 = vld [vmem:[%s254] sm:$0xff]
        %s256 = scalar_lea.vmem %s1, 16
        %v257 = vld [vmem:[%s256] sm:$0xff]
        %s258 = scalar_lea.vmem %s1, 24
        %v259 = vld [vmem:[%s258] sm:$0xff]
        %s260 = scalar_lea.vmem %s1, 32
        %v261 = vld [vmem:[%s260] sm:$0xff]
        %s262 = scalar_lea.vmem %s1, 40
        %v263 = vld [vmem:[%s262] sm:$0xff]
        %s264 = scalar_lea.vmem %s1, 48
        %v265 = vld [vmem:[%s264] sm:$0xff]
        %s266 = scalar_lea.vmem %s1, 56
        %v267 = vld [vmem:[%s266] sm:$0xff]
        %269 = vset.pattern.permute.xlu0 0
        %270 = vperm.xlu0 %269, %v253
        %v271 = vpop.permute.xlu0 %270
        %v273 = vmul.f32 %v251, %v271
        %v274 = vmul.f32 %v252, %v271
        %276 = vset.pattern.permute.xlu0 0
        %277 = vperm.xlu0 %276, %v255
        %v278 = vpop.permute.xlu0 %277
        %v280 = vadd.f32 %v273, %v278
        %v281 = vadd.f32 %v274, %v278
        %283 = vset.pattern.permute.xlu0 0
        %284 = vperm.xlu0 %283, %v261
        %v285 = vpop.permute.xlu0 %284
        %v287 = vmul.f32 %v251, %v285
        %v288 = vmul.f32 %v252, %v285
        %290 = vset.pattern.permute.xlu0 0
        %291 = vperm.xlu0 %290, %v263
        %v292 = vpop.permute.xlu0 %291
        %v294 = vadd.f32 %v287, %v292
        %v295 = vadd.f32 %v288, %v292
        %s296 = smul.u32 %s24, 128
        %s297 = sshra.s32 %s296, 7
        %s298 = sand.u32 %s296, 127
        %s299 = smul.addr %s297, 8
        %s300 = scalar_lea.vmem %s234, %s299
        %v301 = vld [vmem:[%s300] sm:$0xff]
        %303 = vset.pattern.permute.xlu0 0
        %304 = vperm.xlu0 %303, %v257
        %v305 = vpop.permute.xlu0 %304
        %v307 = vmul.f32 %v301, %v305
        %309 = vset.pattern.permute.xlu0 0
        %310 = vperm.xlu0 %309, %v259
        %v311 = vpop.permute.xlu0 %310
        %v313 = vadd.f32 %v307, %v311
        %314 = vxpose.xlu0.b32.start [1/16] %v313, 128
        %315 = vxpose.xlu0.b32.cont [2/16] 0.0, 128
        %316 = vxpose.xlu0.b32.cont [3/16] 0.0, 128
        %317 = vxpose.xlu0.b32.cont [4/16] 0.0, 128
        %318 = vxpose.xlu0.b32.cont [5/16] 0.0, 128
        %319 = vxpose.xlu0.b32.cont [6/16] 0.0, 128
        %320 = vxpose.xlu0.b32.cont [7/16] 0.0, 128
        %321 = vxpose.xlu0.b32.cont [8/16] 0.0, 128
        %322 = vxpose.xlu0.b32.cont [9/16] 0.0, 128
        %323 = vxpose.xlu0.b32.cont [10/16] 0.0, 128
        %324 = vxpose.xlu0.b32.cont [11/16] 0.0, 128
        %325 = vxpose.xlu0.b32.cont [12/16] 0.0, 128
        %326 = vxpose.xlu0.b32.cont [13/16] 0.0, 128
        %327 = vxpose.xlu0.b32.cont [14/16] 0.0, 128
        %328 = vxpose.xlu0.b32.cont [15/16] 0.0, 128
        %329 = vxpose.xlu0.b32.end [16/16] 0.0, 128
        %v330 = vpop.trf.xlu0
        %v331 = vpop.trf.xlu0
        %v332 = vpop.trf.xlu0
        %v333 = vpop.trf.xlu0
        %v334 = vpop.trf.xlu0
        %v335 = vpop.trf.xlu0
        %v336 = vpop.trf.xlu0
        %v337 = vpop.trf.xlu0
        %v338 = vpop.trf.xlu0
        %v339 = vpop.trf.xlu0
        %v340 = vpop.trf.xlu0
        %v341 = vpop.trf.xlu0
        %v342 = vpop.trf.xlu0
        %v343 = vpop.trf.xlu0
        %v344 = vpop.trf.xlu0
        %v345 = vpop.trf.xlu0
        %vm346 = vcmask 64512
        %v348 = vsel %vm346, %v330, 0
        %v351 = vsel %vm346, %v331, 0
        %v354 = vsel %vm346, %v332, 0
        %v357 = vsel %vm346, %v333, 0
        %v360 = vsel %vm346, %v334, 0
        %v363 = vsel %vm346, %v335, 0
        %v366 = vsel %vm346, %v336, 0
        %v369 = vsel %vm346, %v337, 0
        %v372 = vsel %vm346, %v338, 0
        %v375 = vsel %vm346, %v339, 0
        %v378 = vsel %vm346, %v340, 0
        %v381 = vsel %vm346, %v341, 0
        %v384 = vsel %vm346, %v342, 0
        %v387 = vsel %vm346, %v343, 0
        %v390 = vsel %vm346, %v344, 0
        %v393 = vsel %vm346, %v345, 0
        %395 = vmatprep.subr.mxu0 %v295
        %396 = vmatpush1.msra.mxu0 %v294
        %397 = vmatprep.subr.mxu0 0.0
        %398 = vmatpush1.msra.mxu0 0.0
        %399 = vmatprep.subr.mxu0 0.0
        %400 = vmatpush1.msra.mxu0 0.0
        %401 = vmatprep.subr.mxu0 0.0
        %402 = vmatpush1.msra.mxu0 0.0
        %403 = vmatprep.subr.mxu0 0.0
        %404 = vmatpush1.msra.mxu0 0.0
        %405 = vmatprep.subr.mxu0 0.0
        %406 = vmatpush1.msra.mxu0 0.0
        %407 = vmatprep.subr.mxu0 0.0
        %408 = vmatpush1.msra.mxu0 0.0
        %409 = vmatprep.subr.mxu0 0.0
        %410 = vmatpush1.msra.mxu0 0.0
        %411 = vmatprep.subr.mxu0 0.0
        %412 = vmatpush1.msra.mxu0 0.0
        %413 = vmatprep.subr.mxu0 0.0
        %414 = vmatpush1.msra.mxu0 0.0
        %415 = vmatprep.subr.mxu0 0.0
        %416 = vmatpush1.msra.mxu0 0.0
        %417 = vmatprep.subr.mxu0 0.0
        %418 = vmatpush1.msra.mxu0 0.0
        %419 = vmatprep.subr.mxu0 0.0
        %420 = vmatpush1.msra.mxu0 0.0
        %421 = vmatprep.subr.mxu0 0.0
        %422 = vmatpush1.msra.mxu0 0.0
        %423 = vmatprep.subr.mxu0 0.0
        %424 = vmatpush1.msra.mxu0 0.0
        %425 = vmatprep.subr.mxu0 0.0
        %426 = vmatpush1.msra.mxu0 0.0
        %427 = vmatprep.subr.mxu0 0.0
        %428 = vmatpush1.msra.mxu0 0.0
        %429 = vmatprep.subr.mxu0 0.0
        %430 = vmatpush1.msra.mxu0 0.0
        %431 = vmatprep.subr.mxu0 0.0
        %432 = vmatpush1.msra.mxu0 0.0
        %433 = vmatprep.subr.mxu0 0.0
        %434 = vmatpush1.msra.mxu0 0.0
        %435 = vmatprep.subr.mxu0 0.0
        %436 = vmatpush1.msra.mxu0 0.0
        %437 = vmatprep.subr.mxu0 0.0
        %438 = vmatpush1.msra.mxu0 0.0
        %439 = vmatprep.subr.mxu0 0.0
        %440 = vmatpush1.msra.mxu0 0.0
        %441 = vmatprep.subr.mxu0 0.0
        %442 = vmatpush1.msra.mxu0 0.0
        %443 = vmatprep.subr.mxu0 0.0
        %444 = vmatpush1.msra.mxu0 0.0
        %445 = vmatprep.subr.mxu0 0.0
        %446 = vmatpush1.msra.mxu0 0.0
        %447 = vmatprep.subr.mxu0 0.0
        %448 = vmatpush1.msra.mxu0 0.0
        %449 = vmatprep.subr.mxu0 0.0
        %450 = vmatpush1.msra.mxu0 0.0
        %451 = vmatprep.subr.mxu0 0.0
        %452 = vmatpush1.msra.mxu0 0.0
        %453 = vmatprep.subr.mxu0 0.0
        %454 = vmatpush1.msra.mxu0 0.0
        %455 = vmatprep.subr.mxu0 0.0
        %456 = vmatpush1.msra.mxu0 0.0
        %457 = vmatprep.subr.mxu0 0.0
        %458 = vmatpush1.msra.mxu0 0.0
        %459 = vmatprep.mubr.f32.mxu0 0.0
        %460 = vmatmul.mubr.f32.gmra.mrb[0].mxu0 %v348
        %v461 = vpop.f32.mrb[0].mxu0
        %v462 = vadd.f32 0.0, %v461
        %v463 = vpop.f32.mrb[0].mxu0
        %v464 = vadd.f32 0.0, %v463
        %465 = vmatprep.mubr.f32.mxu0 0.0
        %466 = vmatmul.mubr.f32.gmra.mrb[0].mxu0 %v351
        %v467 = vpop.f32.mrb[0].mxu0
        %v468 = vadd.f32 0.0, %v467
        %v469 = vpop.f32.mrb[0].mxu0
        %v470 = vadd.f32 0.0, %v469
        %471 = vmatprep.mubr.f32.mxu0 0.0
        %472 = vmatmul.mubr.f32.gmra.mrb[0].mxu0 %v354
        %v473 = vpop.f32.mrb[0].mxu0
        %v474 = vadd.f32 0.0, %v473
        %v475 = vpop.f32.mrb[0].mxu0
        %v476 = vadd.f32 0.0, %v475
        %477 = vmatprep.mubr.f32.mxu0 0.0
        %478 = vmatmul.mubr.f32.gmra.mrb[0].mxu0 %v357
        %v479 = vpop.f32.mrb[0].mxu0
        %v480 = vadd.f32 0.0, %v479
        %v481 = vpop.f32.mrb[0].mxu0
        %v482 = vadd.f32 0.0, %v481
        %483 = vmatprep.mubr.f32.mxu0 0.0
        %484 = vmatmul.mubr.f32.gmra.mrb[0].mxu0 %v360
        %v485 = vpop.f32.mrb[0].mxu0
        %v486 = vadd.f32 0.0, %v485
        %v487 = vpop.f32.mrb[0].mxu0
        %v488 = vadd.f32 0.0, %v487
        %489 = vmatprep.mubr.f32.mxu0 0.0
        %490 = vmatmul.mubr.f32.gmra.mrb[0].mxu0 %v363
        %v491 = vpop.f32.mrb[0].mxu0
        %v492 = vadd.f32 0.0, %v491
        %v493 = vpop.f32.mrb[0].mxu0
        %v494 = vadd.f32 0.0, %v493
        %495 = vmatprep.mubr.f32.mxu0 0.0
        %496 = vmatmul.mubr.f32.gmra.mrb[0].mxu0 %v366
        %v497 = vpop.f32.mrb[0].mxu0
        %v498 = vadd.f32 0.0, %v497
        %v499 = vpop.f32.mrb[0].mxu0
        %v500 = vadd.f32 0.0, %v499
        %501 = vmatprep.mubr.f32.mxu0 0.0
        %502 = vmatmul.mubr.f32.gmra.mrb[0].mxu0 %v369
        %v503 = vpop.f32.mrb[0].mxu0
        %v504 = vadd.f32 0.0, %v503
        %v505 = vpop.f32.mrb[0].mxu0
        %v506 = vadd.f32 0.0, %v505
        %507 = vmatprep.mubr.f32.mxu0 0.0
        %508 = vmatmul.mubr.f32.gmra.mrb[0].mxu0 %v372
        %v509 = vpop.f32.mrb[0].mxu0
        %v510 = vadd.f32 0.0, %v509
        %v511 = vpop.f32.mrb[0].mxu0
        %v512 = vadd.f32 0.0, %v511
        %513 = vmatprep.mubr.f32.mxu0 0.0
        %514 = vmatmul.mubr.f32.gmra.mrb[0].mxu0 %v375
        %v515 = vpop.f32.mrb[0].mxu0
        %v516 = vadd.f32 0.0, %v515
        %v517 = vpop.f32.mrb[0].mxu0
        %v518 = vadd.f32 0.0, %v517
        %519 = vmatprep.mubr.f32.mxu0 0.0
        %520 = vmatmul.mubr.f32.gmra.mrb[0].mxu0 %v378
        %v521 = vpop.f32.mrb[0].mxu0
        %v522 = vadd.f32 0.0, %v521
        %v523 = vpop.f32.mrb[0].mxu0
        %v524 = vadd.f32 0.0, %v523
        %525 = vmatprep.mubr.f32.mxu0 0.0
        %526 = vmatmul.mubr.f32.gmra.mrb[0].mxu0 %v381
        %v527 = vpop.f32.mrb[0].mxu0
        %v528 = vadd.f32 0.0, %v527
        %v529 = vpop.f32.mrb[0].mxu0
        %v530 = vadd.f32 0.0, %v529
        %531 = vmatprep.mubr.f32.mxu0 0.0
        %532 = vmatmul.mubr.f32.gmra.mrb[0].mxu0 %v384
        %v533 = vpop.f32.mrb[0].mxu0
        %v534 = vadd.f32 0.0, %v533
        %v535 = vpop.f32.mrb[0].mxu0
        %v536 = vadd.f32 0.0, %v535
        %537 = vmatprep.mubr.f32.mxu0 0.0
        %538 = vmatmul.mubr.f32.gmra.mrb[0].mxu0 %v387
        %v539 = vpop.f32.mrb[0].mxu0
        %v540 = vadd.f32 0.0, %v539
        %v541 = vpop.f32.mrb[0].mxu0
        %v542 = vadd.f32 0.0, %v541
        %543 = vmatprep.mubr.f32.mxu0 0.0
        %544 = vmatmul.mubr.f32.gmra.mrb[0].mxu0 %v390
        %v545 = vpop.f32.mrb[0].mxu0
        %v546 = vadd.f32 0.0, %v545
        %v547 = vpop.f32.mrb[0].mxu0
        %v548 = vadd.f32 0.0, %v547
        %549 = vmatprep.mubr.f32.mxu0 0.0
        %550 = vmatmul.mubr.f32.gmra.mrb[0].mxu0 %v393
        %v551 = vpop.f32.mrb[0].mxu0
        %v552 = vadd.f32 0.0, %v551
        %v553 = vpop.f32.mrb[0].mxu0
        %v554 = vadd.f32 0.0, %v553
        %555 = vdwg.mxu0
        %v556 = vmax.f32 %v462, %v464
        %557 = vmax.xlane.f32.xlu0 %v556
        %v558 = vpop.xlane.xlu0 %557
        %v559 = vmax.f32 %v468, %v470
        %560 = vmax.xlane.f32.xlu0 %v559
        %v561 = vpop.xlane.xlu0 %560
        %v562 = vmax.f32 %v474, %v476
        %563 = vmax.xlane.f32.xlu0 %v562
        %v564 = vpop.xlane.xlu0 %563
        %v565 = vmax.f32 %v480, %v482
        %566 = vmax.xlane.f32.xlu0 %v565
        %v567 = vpop.xlane.xlu0 %566
        %v568 = vmax.f32 %v486, %v488
        %569 = vmax.xlane.f32.xlu0 %v568
        %v570 = vpop.xlane.xlu0 %569
        %v571 = vmax.f32 %v492, %v494
        %572 = vmax.xlane.f32.xlu0 %v571
        %v573 = vpop.xlane.xlu0 %572
        %v574 = vmax.f32 %v498, %v500
        %575 = vmax.xlane.f32.xlu0 %v574
        %v576 = vpop.xlane.xlu0 %575
        %v577 = vmax.f32 %v504, %v506
        %578 = vmax.xlane.f32.xlu0 %v577
        %v579 = vpop.xlane.xlu0 %578
        %v580 = vmax.f32 %v510, %v512
        %581 = vmax.xlane.f32.xlu0 %v580
        %v582 = vpop.xlane.xlu0 %581
        %v583 = vmax.f32 %v516, %v518
        %584 = vmax.xlane.f32.xlu0 %v583
        %v585 = vpop.xlane.xlu0 %584
        %v586 = vmax.f32 %v522, %v524
        %587 = vmax.xlane.f32.xlu0 %v586
        %v588 = vpop.xlane.xlu0 %587
        %v589 = vmax.f32 %v528, %v530
        %590 = vmax.xlane.f32.xlu0 %v589
        %v591 = vpop.xlane.xlu0 %590
        %v592 = vmax.f32 %v534, %v536
        %593 = vmax.xlane.f32.xlu0 %v592
        %v594 = vpop.xlane.xlu0 %593
        %v595 = vmax.f32 %v540, %v542
        %596 = vmax.xlane.f32.xlu0 %v595
        %v597 = vpop.xlane.xlu0 %596
        %v598 = vmax.f32 %v546, %v548
        %599 = vmax.xlane.f32.xlu0 %v598
        %v600 = vpop.xlane.xlu0 %599
        %v601 = vmax.f32 %v552, %v554
        %602 = vmax.xlane.f32.xlu0 %v601
        %v603 = vpop.xlane.xlu0 %602
        %v604 = vsub.f32 %v462, %v558
        %v605 = vsub.f32 %v464, %v558
        %v606 = vsub.f32 %v468, %v561
        %v607 = vsub.f32 %v470, %v561
        %v608 = vsub.f32 %v474, %v564
        %v609 = vsub.f32 %v476, %v564
        %v610 = vsub.f32 %v480, %v567
        %v611 = vsub.f32 %v482, %v567
        %v612 = vsub.f32 %v486, %v570
        %v613 = vsub.f32 %v488, %v570
        %v614 = vsub.f32 %v492, %v573
        %v615 = vsub.f32 %v494, %v573
        %v616 = vsub.f32 %v498, %v576
        %v617 = vsub.f32 %v500, %v576
        %v618 = vsub.f32 %v504, %v579
        %v619 = vsub.f32 %v506, %v579
        %v620 = vsub.f32 %v510, %v582
        %v621 = vsub.f32 %v512, %v582
        %v622 = vsub.f32 %v516, %v585
        %v623 = vsub.f32 %v518, %v585
        %v624 = vsub.f32 %v522, %v588
        %v625 = vsub.f32 %v524, %v588
        %v626 = vsub.f32 %v528, %v591
        %v627 = vsub.f32 %v530, %v591
        %v628 = vsub.f32 %v534, %v594
        %v629 = vsub.f32 %v536, %v594
        %v630 = vsub.f32 %v540, %v597
        %v631 = vsub.f32 %v542, %v597
        %v632 = vsub.f32 %v546, %v600
        %v633 = vsub.f32 %v548, %v600
        %v634 = vsub.f32 %v552, %v603
        %v635 = vsub.f32 %v554, %v603
        %v636 = vmul.f32 %v604, 1.442695
        %v637 = vpow.pop %v636
        %v638 = vmul.f32 %v605, 1.442695
        %v639 = vpow.pop %v638
        %v640 = vmul.f32 %v606, 1.442695
        %v641 = vpow.pop %v640
        %v642 = vmul.f32 %v607, 1.442695
        %v643 = vpow.pop %v642
        %v644 = vmul.f32 %v608, 1.442695
        %v645 = vpow.pop %v644
        %v646 = vmul.f32 %v609, 1.442695
        %v647 = vpow.pop %v646
        %v648 = vmul.f32 %v610, 1.442695
        %v649 = vpow.pop %v648
        %v650 = vmul.f32 %v611, 1.442695
        %v651 = vpow.pop %v650
        %v652 = vmul.f32 %v612, 1.442695
        %v653 = vpow.pop %v652
        %v654 = vmul.f32 %v613, 1.442695
        %v655 = vpow.pop %v654
        %v656 = vmul.f32 %v614, 1.442695
        %v657 = vpow.pop %v656
        %v658 = vmul.f32 %v615, 1.442695
        %v659 = vpow.pop %v658
        %v660 = vmul.f32 %v616, 1.442695
        %v661 = vpow.pop %v660
        %v662 = vmul.f32 %v617, 1.442695
        %v663 = vpow.pop %v662
        %v664 = vmul.f32 %v618, 1.442695
        %v665 = vpow.pop %v664
        %v666 = vmul.f32 %v619, 1.442695
        %v667 = vpow.pop %v666
        %v668 = vmul.f32 %v620, 1.442695
        %v669 = vpow.pop %v668
        %v670 = vmul.f32 %v621, 1.442695
        %v671 = vpow.pop %v670
        %v672 = vmul.f32 %v622, 1.442695
        %v673 = vpow.pop %v672
        %v674 = vmul.f32 %v623, 1.442695
        %v675 = vpow.pop %v674
        %v676 = vmul.f32 %v624, 1.442695
        %v677 = vpow.pop %v676
        %v678 = vmul.f32 %v625, 1.442695
        %v679 = vpow.pop %v678
        %v680 = vmul.f32 %v626, 1.442695
        %v681 = vpow.pop %v680
        %v682 = vmul.f32 %v627, 1.442695
        %v683 = vpow.pop %v682
        %v684 = vmul.f32 %v628, 1.442695
        %v685 = vpow.pop %v684
        %v686 = vmul.f32 %v629, 1.442695
        %v687 = vpow.pop %v686
        %v688 = vmul.f32 %v630, 1.442695
        %v689 = vpow.pop %v688
        %v690 = vmul.f32 %v631, 1.442695
        %v691 = vpow.pop %v690
        %v692 = vmul.f32 %v632, 1.442695
        %v693 = vpow.pop %v692
        %v694 = vmul.f32 %v633, 1.442695
        %v695 = vpow.pop %v694
        %v696 = vmul.f32 %v634, 1.442695
        %v697 = vpow.pop %v696
        %v698 = vmul.f32 %v635, 1.442695
        %v699 = vpow.pop %v698
        %v700 = vadd.f32 %v637, %v639
        %701 = vadd.xlane.f32.xlu0 %v700
        %v702 = vpop.xlane.xlu0 %701
        %v703 = vadd.f32 %v641, %v643
        %704 = vadd.xlane.f32.xlu0 %v703
        %v705 = vpop.xlane.xlu0 %704
        %v706 = vadd.f32 %v645, %v647
        %707 = vadd.xlane.f32.xlu0 %v706
        %v708 = vpop.xlane.xlu0 %707
        %v709 = vadd.f32 %v649, %v651
        %710 = vadd.xlane.f32.xlu0 %v709
        %v711 = vpop.xlane.xlu0 %710
        %v712 = vadd.f32 %v653, %v655
        %713 = vadd.xlane.f32.xlu0 %v712
        %v714 = vpop.xlane.xlu0 %713
        %v715 = vadd.f32 %v657, %v659
        %716 = vadd.xlane.f32.xlu0 %v715
        %v717 = vpop.xlane.xlu0 %716
        %v718 = vadd.f32 %v661, %v663
        %719 = vadd.xlane.f32.xlu0 %v718
        %v720 = vpop.xlane.xlu0 %719
        %v721 = vadd.f32 %v665, %v667
        %722 = vadd.xlane.f32.xlu0 %v721
        %v723 = vpop.xlane.xlu0 %722
        %v724 = vadd.f32 %v669, %v671
        %725 = vadd.xlane.f32.xlu0 %v724
        %v726 = vpop.xlane.xlu0 %725
        %v727 = vadd.f32 %v673, %v675
        %728 = vadd.xlane.f32.xlu0 %v727
        %v729 = vpop.xlane.xlu0 %728
        %v730 = vadd.f32 %v677, %v679
        %731 = vadd.xlane.f32.xlu0 %v730
        %v732 = vpop.xlane.xlu0 %731
        %v733 = vadd.f32 %v681, %v683
        %734 = vadd.xlane.f32.xlu0 %v733
        %v735 = vpop.xlane.xlu0 %734
        %v736 = vadd.f32 %v685, %v687
        %737 = vadd.xlane.f32.xlu0 %v736
        %v738 = vpop.xlane.xlu0 %737
        %v739 = vadd.f32 %v689, %v691
        %740 = vadd.xlane.f32.xlu0 %v739
        %v741 = vpop.xlane.xlu0 %740
        %v742 = vadd.f32 %v693, %v695
        %743 = vadd.xlane.f32.xlu0 %v742
        %v744 = vpop.xlane.xlu0 %743
        %v745 = vadd.f32 %v697, %v699
        %746 = vadd.xlane.f32.xlu0 %v745
        %v747 = vpop.xlane.xlu0 %746
        %v748 = vrcp.pop %v702
        %v749 = vmul.f32 %v637, %v748
        %v750 = vmul.f32 %v639, %v748
        %v751 = vrcp.pop %v705
        %v752 = vmul.f32 %v641, %v751
        %v753 = vmul.f32 %v643, %v751
        %v754 = vrcp.pop %v708
        %v755 = vmul.f32 %v645, %v754
        %v756 = vmul.f32 %v647, %v754
        %v757 = vrcp.pop %v711
        %v758 = vmul.f32 %v649, %v757
        %v759 = vmul.f32 %v651, %v757
        %v760 = vrcp.pop %v714
        %v761 = vmul.f32 %v653, %v760
        %v762 = vmul.f32 %v655, %v760
        %v763 = vrcp.pop %v717
        %v764 = vmul.f32 %v657, %v763
        %v765 = vmul.f32 %v659, %v763
        %v766 = vrcp.pop %v720
        %v767 = vmul.f32 %v661, %v766
        %v768 = vmul.f32 %v663, %v766
        %v769 = vrcp.pop %v723
        %v770 = vmul.f32 %v665, %v769
        %v771 = vmul.f32 %v667, %v769
        %v772 = vrcp.pop %v726
        %v773 = vmul.f32 %v669, %v772
        %v774 = vmul.f32 %v671, %v772
        %v775 = vrcp.pop %v729
        %v776 = vmul.f32 %v673, %v775
        %v777 = vmul.f32 %v675, %v775
        %v778 = vrcp.pop %v732
        %v779 = vmul.f32 %v677, %v778
        %v780 = vmul.f32 %v679, %v778
        %v781 = vrcp.pop %v735
        %v782 = vmul.f32 %v681, %v781
        %v783 = vmul.f32 %v683, %v781
        %v784 = vrcp.pop %v738
        %v785 = vmul.f32 %v685, %v784
        %v786 = vmul.f32 %v687, %v784
        %v787 = vrcp.pop %v741
        %v788 = vmul.f32 %v689, %v787
        %v789 = vmul.f32 %v691, %v787
        %v790 = vrcp.pop %v744
        %v791 = vmul.f32 %v693, %v790
        %v792 = vmul.f32 %v695, %v790
        %v793 = vrcp.pop %v747
        %v794 = vmul.f32 %v697, %v793
        %v795 = vmul.f32 %v699, %v793
        %796 = vmatprep.subr.mxu0 %v750
        %797 = vmatpush1.xpose.msra.mxu0 %v749
        %798 = vmatprep.subr.mxu0 %v753
        %799 = vmatpush1.xpose.msra.mxu0 %v752
        %800 = vmatprep.subr.mxu0 %v756
        %801 = vmatpush1.xpose.msra.mxu0 %v755
        %802 = vmatprep.subr.mxu0 %v759
        %803 = vmatpush1.xpose.msra.mxu0 %v758
        %804 = vmatprep.subr.mxu0 %v762
        %805 = vmatpush1.xpose.msra.mxu0 %v761
        %806 = vmatprep.subr.mxu0 %v765
        %807 = vmatpush1.xpose.msra.mxu0 %v764
        %808 = vmatprep.subr.mxu0 %v768
        %809 = vmatpush1.xpose.msra.mxu0 %v767
        %810 = vmatprep.subr.mxu0 %v771
        %811 = vmatpush1.xpose.msra.mxu0 %v770
        %812 = vmatprep.subr.mxu0 %v774
        %813 = vmatpush1.xpose.msra.mxu0 %v773
        %814 = vmatprep.subr.mxu0 %v777
        %815 = vmatpush1.xpose.msra.mxu0 %v776
        %816 = vmatprep.subr.mxu0 %v780
        %817 = vmatpush1.xpose.msra.mxu0 %v779
        %818 = vmatprep.subr.mxu0 %v783
        %819 = vmatpush1.xpose.msra.mxu0 %v782
        %820 = vmatprep.subr.mxu0 %v786
        %821 = vmatpush1.xpose.msra.mxu0 %v785
        %822 = vmatprep.subr.mxu0 %v789
        %823 = vmatpush1.xpose.msra.mxu0 %v788
        %824 = vmatprep.subr.mxu0 %v792
        %825 = vmatpush1.xpose.msra.mxu0 %v791
        %826 = vmatprep.subr.mxu0 %v795
        %827 = vmatpush1.xpose.msra.mxu0 %v794
        %828 = vmatprep.subr.mxu0 0.0
        %829 = vmatpush1.xpose.msra.mxu0 0.0
        %830 = vmatprep.subr.mxu0 0.0
        %831 = vmatpush1.xpose.msra.mxu0 0.0
        %832 = vmatprep.subr.mxu0 0.0
        %833 = vmatpush1.xpose.msra.mxu0 0.0
        %834 = vmatprep.subr.mxu0 0.0
        %835 = vmatpush1.xpose.msra.mxu0 0.0
        %836 = vmatprep.subr.mxu0 0.0
        %837 = vmatpush1.xpose.msra.mxu0 0.0
        %838 = vmatprep.subr.mxu0 0.0
        %839 = vmatpush1.xpose.msra.mxu0 0.0
        %840 = vmatprep.subr.mxu0 0.0
        %841 = vmatpush1.xpose.msra.mxu0 0.0
        %842 = vmatprep.subr.mxu0 0.0
        %843 = vmatpush1.xpose.msra.mxu0 0.0
        %844 = vmatprep.subr.mxu0 0.0
        %845 = vmatpush1.xpose.msra.mxu0 0.0
        %846 = vmatprep.subr.mxu0 0.0
        %847 = vmatpush1.xpose.msra.mxu0 0.0
        %848 = vmatprep.subr.mxu0 0.0
        %849 = vmatpush1.xpose.msra.mxu0 0.0
        %850 = vmatprep.subr.mxu0 0.0
        %851 = vmatpush1.xpose.msra.mxu0 0.0
        %852 = vmatprep.subr.mxu0 0.0
        %853 = vmatpush1.xpose.msra.mxu0 0.0
        %854 = vmatprep.subr.mxu0 0.0
        %855 = vmatpush1.xpose.msra.mxu0 0.0
        %856 = vmatprep.subr.mxu0 0.0
        %857 = vmatpush1.xpose.msra.mxu0 0.0
        %858 = vmatprep.subr.mxu0 0.0
        %859 = vmatpush1.xpose.msra.mxu0 0.0
        %860 = vmatprep.mubr.f32.mxu0 %v281
        %861 = vmatmul.mubr.f32.gmra.mrb[0].mxu0 %v280
        %v862 = vpop.f32.mrb[0].mxu0
        %v863 = vadd.f32 0.0, %v862
        %v864 = vpop.f32.mrb[0].mxu0
        %865 = vdwg.mxu0
        %867 = vset.pattern.permute.xlu0 0
        %868 = vperm.xlu0 %867, %v265
        %v869 = vpop.permute.xlu0 %868
        %v871 = vmul.f32 %v863, %v869
        %873 = vset.pattern.permute.xlu0 0
        %874 = vperm.xlu0 %873, %v267
        %v875 = vpop.permute.xlu0 %874
        %v877 = vadd.f32 %v871, %v875
        %878 = vst [vmem:[%s209] sm:$0xff] %v877
        %879 = vadd.xlane.f32.xlu0 %v877
        %v880 = vpop.xlane.xlu0 %879
        %v881 = vmul.f32 %v880, 0.0078125
        %v882 = vsub.f32 %v877, %v881
        %v883 = vmul.f32 %v882, %v882
        %884 = vadd.xlane.f32.xlu0 %v883
        %v885 = vpop.xlane.xlu0 %884
        %vm886 = vcmask 7168
        %887 = vst.msk [vmem:[%s242] sm:$0xff] %vm886, %v880
        %888 = vst.msk [vmem:[%s250] sm:$0xff] %vm886, %v885
        %s889 = sand.u32 %s88, 1
        %s890 = scalar_lea.sflag [#allocation3], %s889
        %s891 = sand.u32 %s88, 1
        %s892 = smul.addr %s891, 8
        %s893 = scalar_lea.vmem [#allocation2], %s892
        %p894 = scmp.lt.s32.totalorder %s23, 1
        %s895 = scalar_select %p894, %s23, 1
        %p896 = scmp.lt.s32.totalorder %s24, 1
        %s897 = scalar_select %p896, %s24, 1
        %s898 = smul.addr %s895, 2
        %s899 = sadd.s32 %s897, %s898
        %s900 = smul.addr %s899, 8
        %s901 = scalar_lea.vmem %s3, %s900
        %p902 = scmp.lt.s32.totalorder %s23, 1
        %s903 = scalar_select %p902, %s23, 1
        %p904 = scmp.lt.s32.totalorder %s24, 1
        %s905 = scalar_select %p904, %s24, 1
        %s906 = smul.addr %s903, 2
        %s907 = sadd.s32 %s905, %s906
        %s908 = smul.addr %s907, 8
        %s909 = scalar_lea.vmem %s4, %s908
        // Predicated region
        $region29: #{tpu_custom_call.1} parent=27 // pred_check
          %p910 = pneg %p98
        $region30: #{tpu_custom_call.1} parent=27 // pred_check_branch
          %912 = sbr.rel (%p910) target = $region32
        $region31: #{tpu_custom_call.1} parent=27 // pred_region
          %s914 = ssub.s32 128, 128
          %915 = vsyncadd %s890, %s914
          %s916 = smul.addr %s23, 2
          %s917 = sadd.s32 %s24, %s916
          %s918 = smul.addr %s917, 128
          %s919 = scalar_lea.hbm %s2, %s918
          %s921 = sshll.u32 %s893, 4
          %s922 = int_to_ptr.vmem [resolvable:$true] %s921
          %924 = dma.vmem_to_hbm [thread:$0]  %s922, 128, %s919, %s890
        $region32: #{tpu_custom_call.1} parent=27 // pred_fallthru
          _
        // Predicated region
        $region33: #{tpu_custom_call.1} parent=27 // pred_check
          %p925 = pneg %p126
        $region34: #{tpu_custom_call.1} parent=27 // pred_check_branch
          %927 = sbr.rel (%p925) target = $region36
        $region35: #{tpu_custom_call.1} parent=27 // pred_region
          _
        $region36: #{tpu_custom_call.1} parent=27 // pred_fallthru
          _
        // Predicated region
        $region37: #{tpu_custom_call.1} parent=27 // pred_check
          %p928 = pneg %p154
        $region38: #{tpu_custom_call.1} parent=27 // pred_check_branch
          %930 = sbr.rel (%p928) target = $region40
        $region39: #{tpu_custom_call.1} parent=27 // pred_region
          _
        $region40: #{tpu_custom_call.1} parent=27 // pred_fallthru
          _
      $region28: #{tpu_custom_call.1} parent=5 // pred_fallthru
        _
      %p931 = scmp.le.s32.totalorder 2, %s14
      // Predicated region
      $region41: #{tpu_custom_call.1} parent=5 // pred_check
        %p932 = pneg %p931
      $region42: #{tpu_custom_call.1} parent=5 // pred_check_branch
        %934 = sbr.rel (%p932) target = $region44
      $region43: #{tpu_custom_call.1} parent=5 // pred_region
        %s935 = ssub.s32 %s14, 2
        // Predicated region
        $region45: #{tpu_custom_call.1} parent=43 // pred_check
          %p936 = pneg %p104
        $region46: #{tpu_custom_call.1} parent=43 // pred_check_branch
          %938 = sbr.rel (%p936) target = $region48
        $region47: #{tpu_custom_call.1} parent=43 // pred_region
          %s939 = sand.u32 %s89, 1
          %s940 = scalar_lea.sflag [#allocation3], %s939
          %s941 = sand.u32 %s89, 1
          %s942 = smul.addr %s941, 8
          %s943 = scalar_lea.vmem [#allocation2], %s942
          %944 = dma.done %s940, 128
        $region48: #{tpu_custom_call.1} parent=43 // pred_fallthru
          _
        // Predicated region
        $region49: #{tpu_custom_call.1} parent=43 // pred_check
          %p945 = pneg %p132
        $region50: #{tpu_custom_call.1} parent=43 // pred_check_branch
          %947 = sbr.rel (%p945) target = $region52
        $region51: #{tpu_custom_call.1} parent=43 // pred_region
          %p948 = scmp.lt.s32.totalorder %s25, 1
          %s949 = scalar_select %p948, %s25, 1
          %p950 = scmp.lt.s32.totalorder %s26, 1
          %s951 = scalar_select %p950, %s26, 1
          %s952 = smul.addr %s949, 2
          %s953 = sadd.s32 %s951, %s952
          %s954 = smul.addr %s953, 8
          %s955 = scalar_lea.vmem %s3, %s954
        $region52: #{tpu_custom_call.1} parent=43 // pred_fallthru
          _
        // Predicated region
        $region53: #{tpu_custom_call.1} parent=43 // pred_check
          %p956 = pneg %p160
        $region54: #{tpu_custom_call.1} parent=43 // pred_check_branch
          %958 = sbr.rel (%p956) target = $region56
        $region55: #{tpu_custom_call.1} parent=43 // pred_region
          %p959 = scmp.lt.s32.totalorder %s25, 1
          %s960 = scalar_select %p959, %s25, 1
          %p961 = scmp.lt.s32.totalorder %s26, 1
          %s962 = scalar_select %p961, %s26, 1
          %s963 = smul.addr %s960, 2
          %s964 = sadd.s32 %s962, %s963
          %s965 = smul.addr %s964, 8
          %s966 = scalar_lea.vmem %s4, %s965
        $region56: #{tpu_custom_call.1} parent=43 // pred_fallthru
          _
      $region44: #{tpu_custom_call.1} parent=5 // pred_fallthru
        _
    $region6: #{tpu_custom_call.1} parent=1 // loop_footer
      %s18 = sadd.s32 1, %s14
    $region7: #{tpu_custom_call.1} parent=1 // loop_footer_branch
      %13 = sbr.rel target = $region3
    $region8: #{tpu_custom_call.1} parent=1 // loop_exit
      _
    %967 = vsyncpa [#allocation3], 1
    %s968 = scalar_lea.sflag [#allocation3], 1
    %969 = vsyncpa %s968, 1

</llo_original>
